<compile_context>
chip_gen: v6e
topology: v6e:2x2x1
jax: 0.10.0
libtpu: 0.0.40
codegen_flags: <defaults>
</compile_context>

<pallas_src>
import math
from functools import partial

import numpy as np
import jax
import jax.numpy as jnp
from jax.experimental import pallas as pl
from jax.experimental.pallas import tpu as pltpu

TWO_PI = 2.0 * math.pi


def _round_up(x, n):
    return ((x + n - 1) // n) * n


def _sin_pi_poly_coeffs(degree=11):
    """Odd-power least-squares fit of sin(pi*z) on Chebyshev nodes in [-1, 1]."""
    n = 1024
    z = np.cos(np.pi * (np.arange(n) + 0.5) / n)
    powers = np.arange(1, degree + 1, 2)
    a = z[:, None] ** powers[None, :]
    c, *_ = np.linalg.lstsq(a, np.sin(np.pi * z), rcond=None)
    return tuple(float(v) for v in c)


# Coefficients for sin(pi*z) ~= z*(c0 + c1*z^2 + c2*z^4 + ...), |err| ~ 1e-6.
_SIN_PI_COEFFS = _sin_pi_poly_coeffs(degree=11)


def _fourier_pe_kernel(x_ref, w_ref, o_ref):
    # x_ref: (tile_m, k_dim)   -- one tile of (row-packed) input rows
    # w_ref: (k_dim, n_dim)    -- (block-diagonal) projection, VMEM-resident
    # o_ref: (tile_m, n_dim)
    x = x_ref[...].astype(jnp.float32)
    w = w_ref[...].astype(jnp.float32)

    # Tiny-K contraction on the (otherwise idle) MXU; frees VALU/XLU slots for
    # the sin polynomial below.
    t = jnp.dot(x, w, preferred_element_type=jnp.float32)

    # sin(2*pi*t): period-1 range reduction, then odd polynomial for sin(pi*z).
    u = t - jnp.floor(t + 0.5)          # u in (-0.5, 0.5]
    z = u + u                           # z in (-1, 1]
    z2 = z * z
    p = jnp.float32(_SIN_PI_COEFFS[-1])
    for c in _SIN_PI_COEFFS[-2::-1]:
        p = p * z2 + jnp.float32(c)
    o_ref[...] = (z * p).astype(o_ref.dtype)


def _pick_tile_m(m_rows, k_dim, n_dim, requested):
    # Keep double-buffered in+out tiles (f32, lane-padded in VMEM) within ~24 MiB
    # so the same tiling fits v7x's 64 MiB physical VMEM with headroom; v5e/v6e
    # (128 MiB) are comfortably under budget too.
    budget = 24 * 1024 * 1024
    x_row_bytes = _round_up(max(k_dim, 128), 128) * 4
    out_row_bytes = _round_up(max(n_dim, 128), 128) * 4
    cap = budget // (2 * (x_row_bytes + out_row_bytes))
    cap = max(256, (cap // 8) * 8)
    tm = min(requested, cap, _round_up(m_rows, 8))
    return max(tm, 8)


@partial(jax.jit, static_argnames=("tile_m", "out_dtype"))
def fourier_positional_encoding(x, proj_matrix, *, tile_m=8192, out_dtype=None):
    """JAX/Pallas equivalent of FourierPositionalEncoding.forward.

    out = sin(2*pi * einsum('...i,ij->...j', x, proj_matrix))
    """
    in_dim, out_dim = proj_matrix.shape
    assert x.shape[-1] == in_dim, (
        f"Expected input to have {in_dim} channels but found {x.shape[-1]}"
    )
    out_dtype = x.dtype if out_dtype is None else jnp.dtype(out_dtype)

    lead_shape = x.shape[:-1]
    m = math.prod(lead_shape)
    x2d = x.reshape(m, in_dim)
    w = proj_matrix.astype(jnp.float32)

    # Row-packing factor: each 128-lane output row carries r real rows.
    if 0 < out_dim < 128 and 128 % out_dim == 0:
        r = 128 // out_dim
    else:
        r = 1

    m_pad = _round_up(max(m, 1), r)
    if m_pad != m:
        x2d = jnp.pad(x2d, ((0, m_pad - m), (0, 0)))
    mp = m_pad // r                    # packed row count
    k_dim = r * in_dim
    n_dim = r * out_dim

    if r > 1:
        x_packed = x2d.reshape(mp, k_dim)
        eye = jnp.eye(r, dtype=w.dtype)
        w_pack = jnp.einsum("rs,ij->risj", eye, w).reshape(k_dim, n_dim)
    else:
        x_packed = x2d
        w_pack = w

    tm = _pick_tile_m(mp, k_dim, n_dim, tile_m)
    grid = (pl.cdiv(mp, tm),)

    out_packed = pl.pallas_call(
        _fourier_pe_kernel,
        out_shape=jax.ShapeDtypeStruct((mp, n_dim), out_dtype),
        grid=grid,
        in_specs=[
            pl.BlockSpec((tm, k_dim), lambda i: (i, 0)),        # stream packed rows
            pl.BlockSpec((k_dim, n_dim), lambda i: (0, 0)),     # VMEM-resident weight
        ],
        out_specs=pl.BlockSpec((tm, n_dim), lambda i: (i, 0)),
        compiler_params=pltpu.CompilerParams(
            dimension_semantics=("parallel",),                  # shard tiles across TCs
            vmem_limit_bytes=48 * 1024 * 1024,
        ),
    )(x_packed, w_pack)

    out2d = out_packed.reshape(m_pad, out_dim)
    if m_pad != m:
        out2d = out2d[:m]
    return out2d.reshape(*lead_shape, out_dim)


def reference_fourier_positional_encoding(x, proj_matrix):
    y = jnp.einsum("...i,ij->...j", x, proj_matrix)
    return jnp.sin(TWO_PI * y)


if __name__ == "__main__":
    key = jax.random.PRNGKey(0)
    kx, kw = jax.random.split(key)

    # Small shapes consistent with the module: batch=2, seq=8, in_dim=4, out_dim=32.
    batch, seq, in_dim, out_dim = 2, 8, 4, 32
    x = jax.random.normal(kx, (batch, seq, in_dim), dtype=jnp.float32)
    proj_matrix = jax.random.normal(kw, (in_dim, out_dim), dtype=jnp.float32)

    out = fourier_positional_encoding(x, proj_matrix)
    out = jax.block_until_ready(out)
    ref = reference_fourier_positional_encoding(x, proj_matrix)
    assert out.shape == (batch, seq, out_dim), out.shape
    assert jnp.allclose(out, ref, atol=1e-4, rtol=1e-4), "mismatch vs reference"

    # Multi-tile, row-packed, partial-last-block path (m=1200 -> 300 packed rows).
    kx2, _ = jax.random.split(kw)
    x2 = jax.random.normal(kx2, (3, 400, in_dim), dtype=jnp.float32)
    out2 = jax.block_until_ready(fourier_positional_encoding(x2, proj_matrix, tile_m=256))
    ref2 = reference_fourier_positional_encoding(x2, proj_matrix)
    assert out2.shape == (3, 400, out_dim), out2.shape
    assert jnp.allclose(out2, ref2, atol=1e-4, rtol=1e-4), "mismatch vs reference (tiled)"

    # Non-packable out_dim (128 % 48 != 0 -> r=1, true-width masked stores).
    ky, kw3 = jax.random.split(kx2)
    proj3 = jax.random.normal(kw3, (in_dim, 48), dtype=jnp.float32)
    x3 = jax.random.normal(ky, (5, 7, in_dim), dtype=jnp.float32)
    out3 = jax.block_until_ready(fourier_positional_encoding(x3, proj3))
    ref3 = reference_fourier_positional_encoding(x3, proj3)
    assert out3.shape == (5, 7, 48), out3.shape
    assert jnp.allclose(out3, ref3, atol=1e-4, rtol=1e-4), "mismatch vs reference (r=1)"

    # Row count not divisible by the packing factor (m=7, r=4 -> padded rows sliced off).
    x4 = jax.random.normal(ky, (7, in_dim), dtype=jnp.float32)
    out4 = jax.block_until_ready(fourier_positional_encoding(x4, proj_matrix))
    ref4 = reference_fourier_positional_encoding(x4, proj_matrix)
    assert out4.shape == (7, out_dim), out4.shape
    assert jnp.allclose(out4, ref4, atol=1e-4, rtol=1e-4), "mismatch vs reference (ragged)"

    print("KERNEL_OK")
</pallas_src>

<mosaic_0001>
module attributes {stable_mosaic.version = 11 : i64} {
  func.func @_fourier_pe_kernel(%arg0: i32, %arg1: memref<8x16xf32, #tpu.memory_space<vmem>>, %arg2: memref<16x128xf32, #tpu.memory_space<vmem>>, %arg3: memref<8x128xf32, #tpu.memory_space<vmem>>) attributes {dimension_semantics = [#tpu.dimension_semantics<parallel>], iteration_bounds = array<i64: 1>, scalar_prefetch = 0 : i64, scratch_operands = 0 : i64, tpu.core_type = #tpu.core_type<tc>, window_params = [{transform_indices = @transform_0, window_bounds = array<i64: 8, 16>}, {pipeline_mode = #tpu.pipeline_mode<synchronous>, transform_indices = @transform_1, window_bounds = array<i64: 16, 128>}, {transform_indices = @transform_2, window_bounds = array<i64: 8, 128>}]} {
    %c0 = arith.constant 0 : index
    %c0_0 = arith.constant 0 : index
    %0 = vector.load %arg1[%c0, %c0_0] : memref<8x16xf32, #tpu.memory_space<vmem>>, vector<8x16xf32>
    %c0_1 = arith.constant 0 : index
    %c0_2 = arith.constant 0 : index
    %1 = vector.load %arg2[%c0_1, %c0_2] : memref<16x128xf32, #tpu.memory_space<vmem>>, vector<16x128xf32>
    %cst = arith.constant dense<0.000000e+00> : vector<8x128xf32>
    %2 = tpu.matmul %0, %1, %cst {dimension_numbers = #tpu.dot_dimension_numbers<[1], [0], [0], [1], [0, 0, 1, 1], [], []>} : vector<8x16xf32>, vector<16x128xf32>, vector<8x128xf32> -> vector<8x128xf32>
    %cst_3 = arith.constant 5.000000e-01 : f32
    %3 = vector.broadcast %cst_3 : f32 to vector<8x128xf32>
    %4 = arith.addf %2, %3 : vector<8x128xf32>
    %5 = math.floor %4 : vector<8x128xf32>
    %6 = arith.subf %2, %5 : vector<8x128xf32>
    %7 = arith.addf %6, %6 : vector<8x128xf32>
    %8 = arith.mulf %7, %7 : vector<8x128xf32>
    %cst_4 = arith.constant -0.00599065423 : f32
    %9 = vector.broadcast %cst_4 : f32 to vector<8x128xf32>
    %10 = arith.mulf %9, %8 : vector<8x128xf32>
    %cst_5 = arith.constant 0.0804760605 : f32
    %11 = vector.broadcast %cst_5 : f32 to vector<8x128xf32>
    %12 = arith.addf %10, %11 : vector<8x128xf32>
    %13 = arith.mulf %12, %8 : vector<8x128xf32>
    %cst_6 = arith.constant -0.598278821 : f32
    %14 = vector.broadcast %cst_6 : f32 to vector<8x128xf32>
    %15 = arith.addf %13, %14 : vector<8x128xf32>
    %16 = arith.mulf %15, %8 : vector<8x128xf32>
    %cst_7 = arith.constant 2.54987931 : f32
    %17 = vector.broadcast %cst_7 : f32 to vector<8x128xf32>
    %18 = arith.addf %16, %17 : vector<8x128xf32>
    %19 = arith.mulf %18, %8 : vector<8x128xf32>
    %cst_8 = arith.constant -5.1676774 : f32
    %20 = vector.broadcast %cst_8 : f32 to vector<8x128xf32>
    %21 = arith.addf %19, %20 : vector<8x128xf32>
    %22 = arith.mulf %21, %8 : vector<8x128xf32>
    %cst_9 = arith.constant 3.14159131 : f32
    %23 = vector.broadcast %cst_9 : f32 to vector<8x128xf32>
    %24 = arith.addf %22, %23 : vector<8x128xf32>
    %25 = arith.mulf %7, %24 : vector<8x128xf32>
    %c0_10 = arith.constant 0 : index
    %c0_11 = arith.constant 0 : index
    %26 = vector.load %arg3[%c0_10, %c0_11] : memref<8x128xf32, #tpu.memory_space<vmem>>, vector<8x128xf32>
    tpu.vector_store %arg3[%c0_10, %c0_11], %25 {strides = array<i32>} : memref<8x128xf32, #tpu.memory_space<vmem>>, vector<8x128xf32>,
    return
  }
  func.func @transform_0(%arg0: i32) -> (i32, i32) {
    %c0_i32 = arith.constant 0 : i32
    %c0_i32_0 = arith.constant 0 : i32
    return %arg0, %c0_i32 : i32, i32
  }
  func.func @transform_1(%arg0: i32) -> (i32, i32) {
    %c0_i32 = arith.constant 0 : i32
    %c0_i32_0 = arith.constant 0 : i32
    %c0_i32_1 = arith.constant 0 : i32
    return %c0_i32, %c0_i32_0 : i32, i32
  }
  func.func @transform_2(%arg0: i32) -> (i32, i32) {
    %c0_i32 = arith.constant 0 : i32
    %c0_i32_0 = arith.constant 0 : i32
    return %arg0, %c0_i32 : i32, i32
  }
}

</mosaic_0001>

<llo_original>
// kernel: fourier_positional_encoding.1
$region0: #{fourier_positional_encoding.1}
  #allocation0 [shape = 'u32[]', space=smem, size = 0x4, offset = 0x4, fixed_abs, tag = 'smem constant byte address 0x4 - core index']
  #allocation1 [shape = 'u32[144,128]{1,0:T(1,128)}', space=vmem, size = 0x12000, scoped, tag = 'internal scratch']
  %s0 = inlined_call_operand.vmem [shape: f32[4,16], index: 0, kind: input, shape index: {}]
  %s1 = inlined_call_operand.vmem [shape: f32[16,128], index: 1, kind: input, shape index: {}]
  %s2 = inlined_call_operand.vmem [shape: f32[4,128], index: 2, kind: output, shape index: {}]
  %s3 = sld [smem:[#allocation0]]
  $region48: #{fourier_positional_encoding.1} parent=0
    _
  %s5 = ssub.s32 1, %s3
  %s6 = scalar_select 0, %s5, %s3
  $region1: #{fourier_positional_encoding.1} parent=0
    #allocation2 [shape = 'u8[4096]{0}', space=vmem, size = 0x1000, scoped, tag = 'output window, operand 0, single buffered']
    // Predicated region
    $region2: #{fourier_positional_encoding.1} parent=1 // pred_check
      _
    $region3: #{fourier_positional_encoding.1} parent=1 // pred_check_branch
      %8 = sbr.rel (0) target = $region5
    $region4: #{fourier_positional_encoding.1} parent=1 // pred_region
      _
    $region5: #{fourier_positional_encoding.1} parent=1 // pred_fallthru
      _
    // Predicated region
    $region6: #{fourier_positional_encoding.1} parent=1 // pred_check
      _
    $region7: #{fourier_positional_encoding.1} parent=1 // pred_check_branch
      %10 = sbr.rel (0) target = $region9
    $region8: #{fourier_positional_encoding.1} parent=1 // pred_region
      _
    $region9: #{fourier_positional_encoding.1} parent=1 // pred_fallthru
      _
    %v11 = vld [vmem:[%s0] sm:$0xff]
    %v12 = vld [vmem:[%s1] sm:$0xff]
    %v13 = vld [vmem:[%s1 + $0x8] sm:$0xff]
    %vm14 = vcmask 130048
    %v16 = vsel %vm14, %v11, 0
    %18 = vmatprep.subr.mxu0 0.0
    %19 = vmatpush1.msra.mxu0 0.0
    %20 = vmatprep.subr.mxu0 0.0
    %21 = vmatpush1.msra.mxu0 0.0
    %22 = vmatprep.subr.mxu0 0.0
    %23 = vmatpush1.msra.mxu0 0.0
    %24 = vmatprep.subr.mxu0 0.0
    %25 = vmatpush1.msra.mxu0 0.0
    %26 = vmatprep.subr.mxu0 0.0
    %27 = vmatpush1.msra.mxu0 0.0
    %28 = vmatprep.subr.mxu0 0.0
    %29 = vmatpush1.msra.mxu0 0.0
    %30 = vmatprep.subr.mxu0 0.0
    %31 = vmatpush1.msra.mxu0 0.0
    %32 = vmatprep.subr.mxu0 0.0
    %33 = vmatpush1.msra.mxu0 0.0
    %34 = vmatprep.subr.mxu0 0.0
    %35 = vmatpush1.msra.mxu0 0.0
    %36 = vmatprep.subr.mxu0 0.0
    %37 = vmatpush1.msra.mxu0 0.0
    %38 = vmatprep.subr.mxu0 0.0
    %39 = vmatpush1.msra.mxu0 0.0
    %40 = vmatprep.subr.mxu0 0.0
    %41 = vmatpush1.msra.mxu0 0.0
    %42 = vmatprep.subr.mxu0 0.0
    %43 = vmatpush1.msra.mxu0 0.0
    %44 = vmatprep.subr.mxu0 0.0
    %45 = vmatpush1.msra.mxu0 0.0
    %46 = vmatprep.subr.mxu0 0.0
    %47 = vmatpush1.msra.mxu0 %v13
    %48 = vmatprep.subr.mxu0 0.0
    %49 = vmatpush1.msra.mxu0 %v12
    %50 = vmatprep.subr.mxu0 0.0
    %51 = vmatpush2.msra.mxu0 0.0
    %52 = vmatprep.subr.mxu0 0.0
    %53 = vmatpush2.msra.mxu0 0.0
    %54 = vmatprep.subr.mxu0 0.0
    %55 = vmatpush2.msra.mxu0 0.0
    %56 = vmatprep.subr.mxu0 0.0
    %57 = vmatpush2.msra.mxu0 0.0
    %58 = vmatprep.subr.mxu0 0.0
    %59 = vmatpush2.msra.mxu0 0.0
    %60 = vmatprep.subr.mxu0 0.0
    %61 = vmatpush2.msra.mxu0 0.0
    %62 = vmatprep.subr.mxu0 0.0
    %63 = vmatpush2.msra.mxu0 0.0
    %64 = vmatprep.subr.mxu0 0.0
    %65 = vmatpush2.msra.mxu0 0.0
    %66 = vmatprep.subr.mxu0 0.0
    %67 = vmatpush2.msra.mxu0 0.0
    %68 = vmatprep.subr.mxu0 0.0
    %69 = vmatpush2.msra.mxu0 0.0
    %70 = vmatprep.subr.mxu0 0.0
    %71 = vmatpush2.msra.mxu0 0.0
    %72 = vmatprep.subr.mxu0 0.0
    %73 = vmatpush2.msra.mxu0 0.0
    %74 = vmatprep.subr.mxu0 0.0
    %75 = vmatpush2.msra.mxu0 0.0
    %76 = vmatprep.subr.mxu0 0.0
    %77 = vmatpush2.msra.mxu0 0.0
    %78 = vmatprep.subr.mxu0 0.0
    %79 = vmatpush2.msra.mxu0 0.0
    %80 = vmatprep.subr.mxu0 0.0
    %81 = vmatpush2.msra.mxu0 0.0
    %82 = vmatprep.mubr.f32.mxu0 0.0
    %83 = vmatmul.mubr.f32.gmra.mxu0 %v16
    %v84 = vpop.f32.mrf.mxu0
    %v85 = vadd.f32 0.0, %v84
    %v86 = vpop.f32.mrf.mxu0
    %87 = vdwg.mxu0
    %v88 = vadd.f32 %v85, 0.5
    %v89 = vfloor.f32 %v88
    %v90 = vsub.f32 %v85, %v89
    %v91 = vadd.f32 %v90, %v90
    %v92 = vmul.f32 %v91, %v91
    %v93 = vmul.f32 %v92, -0.005990654
    %v94 = vadd.f32 %v93, 0.08047606
    %v95 = vmul.f32 %v94, %v92
    %v96 = vadd.f32 %v95, -0.5982788
    %v97 = vmul.f32 %v96, %v92
    %v98 = vadd.f32 %v97, 2.5498793
    %v99 = vmul.f32 %v98, %v92
    %v100 = vadd.f32 %v99, -5.1676774
    %v101 = vmul.f32 %v100, %v92
    %v102 = vadd.f32 %v101, 3.1415913
    %v103 = vmul.f32 %v91, %v102
    %104 = vst [vmem:[#allocation2] sm:$0xff] %v103
    // Predicated region
    $region10: #{fourier_positional_encoding.1} parent=1 // pred_check
      _
    $region11: #{fourier_positional_encoding.1} parent=1 // pred_check_branch
      %106 = sbr.rel (0) target = $region13
    $region12: #{fourier_positional_encoding.1} parent=1 // pred_region
      // Predicated region
      $region14: #{fourier_positional_encoding.1} parent=12 // pred_check
        _
      $region15: #{fourier_positional_encoding.1} parent=12 // pred_check_branch
        %108 = sbr.rel (0) target = $region17
      $region16: #{fourier_positional_encoding.1} parent=12 // pred_region
        // Predicated region
        $region18: #{fourier_positional_encoding.1} parent=16 // pred_check
          _
        $region19: #{fourier_positional_encoding.1} parent=16 // pred_check_branch
          %110 = sbr.rel target = $region21
        $region20: #{fourier_positional_encoding.1} parent=16 // pred_region
          // Predicated region
          $region33: #{fourier_positional_encoding.1} parent=20 // pred_check
            _
          $region34: #{fourier_positional_encoding.1} parent=20 // pred_check_branch
            %126 = sbr.rel (0) target = $region36
          $region35: #{fourier_positional_encoding.1} parent=20 // pred_region
            %s128 = ssub.s32 16, 1
            loop: start=0, step=1, limit=1
            $region37: #{fourier_positional_encoding.1} parent=35 // loop_pre_header
              _
            $region38: #{fourier_positional_encoding.1} parent=35 // loop_header
              %s130 = sphi 0, %s134
              %p131 = scmp.ge.s32.totalorder %s130, 1
              %s135 = sphi [#allocation2], [#allocation2]
              %s136 = sphi %s2, %s2
            $region39: #{fourier_positional_encoding.1} parent=35 // loop_header_branch
              %133 = sbr.rel (%p131) target = $region43
            $region40: #{fourier_positional_encoding.1} parent=35 // loop_body
              %v137 = vld [vmem:[%s135] sm:%s128]
              %138 = vst [vmem:[%s136] sm:%s128] %v137
            $region41: #{fourier_positional_encoding.1} parent=35 // loop_footer
              %s134 = sadd.s32 1, %s130
            $region42: #{fourier_positional_encoding.1} parent=35 // loop_footer_branch
              %129 = sbr.rel target = $region38
            $region43: #{fourier_positional_encoding.1} parent=35 // loop_exit
              _
          $region36: #{fourier_positional_encoding.1} parent=20 // pred_fallthru
            _
        $region21: #{fourier_positional_encoding.1} parent=16 // pred_fallthru
          _
        // Predicated region
        $region22: #{fourier_positional_encoding.1} parent=16 // pred_check
          _
        $region23: #{fourier_positional_encoding.1} parent=16 // pred_check_branch
          %112 = sbr.rel (0) target = $region25
        $region24: #{fourier_positional_encoding.1} parent=16 // pred_region
          %s114 = ssub.s32 16, 1
          loop: start=0, step=1, limit=1
          $region26: #{fourier_positional_encoding.1} parent=24 // loop_pre_header
            _
          $region27: #{fourier_positional_encoding.1} parent=24 // loop_header
            %s116 = sphi 0, %s120
            %p117 = scmp.ge.s32.totalorder %s116, 1
            %s121 = sphi [#allocation2], [#allocation2]
            %s122 = sphi %s2, %s2
          $region28: #{fourier_positional_encoding.1} parent=24 // loop_header_branch
            %119 = sbr.rel (%p117) target = $region32
          $region29: #{fourier_positional_encoding.1} parent=24 // loop_body
            %v123 = vld [vmem:[%s121] sm:%s114]
            %124 = vst [vmem:[%s122] sm:%s114] %v123
          $region30: #{fourier_positional_encoding.1} parent=24 // loop_footer
            %s120 = sadd.s32 1, %s116
          $region31: #{fourier_positional_encoding.1} parent=24 // loop_footer_branch
            %115 = sbr.rel target = $region27
          $region32: #{fourier_positional_encoding.1} parent=24 // loop_exit
            _
        $region25: #{fourier_positional_encoding.1} parent=16 // pred_fallthru
          _
      $region17: #{fourier_positional_encoding.1} parent=12 // pred_fallthru
        _
      %139 = vnop
    $region13: #{fourier_positional_encoding.1} parent=1 // pred_fallthru
      _
    // Predicated region
    $region44: #{fourier_positional_encoding.1} parent=1 // pred_check
      _
    $region45: #{fourier_positional_encoding.1} parent=1 // pred_check_branch
      %141 = sbr.rel (0) target = $region47
    $region46: #{fourier_positional_encoding.1} parent=1 // pred_region
      _
    $region47: #{fourier_positional_encoding.1} parent=1 // pred_fallthru
      _

</llo_original>
